<compile_context>
chip_gen: v7x
topology: tpu7x:2x2x1
jax: 0.10.0
libtpu: 0.0.40
codegen_flags: <defaults>
</compile_context>

<pallas_src>
import numpy as np
import jax
import jax.numpy as jnp
from jax import lax
from jax.experimental import pallas as pl
from jax.experimental.pallas import tpu as pltpu

# 4x4 / stride-2 kernel index decomposition:  2*ho + ki - 1 = 2*(ho + _DI[ki]) + _PP[ki]
_DI = (-1, 0, 0, 1)
_PP = (1, 0, 1, 0)
_EPS = 1e-5
_SLOPE = 0.1


def _build_masks(Hh, Wh, S, S_pad):
    """(24, S_pad) f32 constant.

    rows 0..8 : 0/1 validity mask of tap (di, dj) = (row // 3 - 1, row % 3 - 1)
                (1 where the rolled read stays inside the image AND the column is a real pixel)
    row  16   : 1 on real pixels (m < S), 0 on lane padding -> becomes the "ones" row that
                carries the conv bias through the stacked matmul (rows 17..23 stay zero and line
                up with zero weight columns).
    """
    mk = np.zeros((24, S_pad), np.float32)
    for i in range(Hh):
        for j in range(Wh):
            m = i * Wh + j
            mk[16, m] = 1.0
            for di in (-1, 0, 1):
                if not 0 <= i + di < Hh:
                    continue
                for dj in (-1, 0, 1):
                    if 0 <= j + dj < Wh:
                        mk[(di + 1) * 3 + (dj + 1), m] = 1.0
    return mk


def _build_group_mat(C):
    """(R1, R1) 0/1 matrix: (G @ v)[r] = sum of v over all rows with the same channel r % C.

    One small matmul both reduces the 4 space-to-depth rows of each input channel and broadcasts
    the per-channel statistic back to all of its rows.
    """
    R1 = 4 * C
    g = np.zeros((R1, R1), np.float32)
    for r in range(R1):
        for r2 in range(R1):
            if r % C == r2 % C:
                g[r, r2] = 1.0
    return g


def _make_encoder_kernel(C, Co, Wh, S, S_pad):
    R1 = 4 * C                       # space-to-depth rows: (p, q, c)
    K1 = 9 * R1 + 8                  # conv1 contraction depth (9 taps + bias block)
    K2 = 9 * Co + 8                  # conv2 contraction depth
    inv1 = 1.0 / float(4 * S)        # elements per (n, c) plane of the input  (= H * W)
    inv2 = 1.0 / float(S)            # elements per (n, c) plane after conv1   (= Ho * Wo)
    deltas = [di * Wh + dj for di in (-1, 0, 1) for dj in (-1, 0, 1)]
    f32 = jnp.float32
    bf16 = jnp.bfloat16

    def kernel(xs_ref, w1_ref, w2_ref, mk_ref, gmat_ref, out_ref, g1_ref, g2_ref):
        xs = xs_ref[...]                                             # (R1, S_pad) f32, one image

        mrow = [mk_ref[dd:dd + 1, :] for dd in range(9)]             # tap masks, each (1, S_pad)
        bias_blk = mk_ref[16:24, :]                                  # (8, S_pad): row0 = real-pixel mask

        # ---- InstanceNorm(x) + LeakyReLU(0.1): exact f32 one-pass stats per input channel ----
        # (pad lanes of xs are zero, so plain lane sums with the true counts are exact)
        row_s = jnp.sum(xs, axis=-1, keepdims=True)                  # (R1, 1)
        row_q = jnp.sum(xs * xs, axis=-1, keepdims=True)
        ch_s = jnp.dot(gmat_ref[...], row_s, preferred_element_type=f32)   # channel sums,
        ch_q = jnp.dot(gmat_ref[...], row_q, preferred_element_type=f32)   # broadcast to all rows
        mu1 = ch_s * inv1
        var1 = ch_q * inv1 - mu1 * mu1
        a1 = (xs - mu1) * lax.rsqrt(var1 + _EPS)
        a1 = jnp.where(a1 >= 0, a1, _SLOPE * a1)

        # ---- conv1: 4x4 / stride 2 / pad 1 as 9 rolled+masked taps -> one wide bf16 matmul ----
        # NOTE: whole image is one lane block; tiling the pixel axis would need a +/-Wh-lane halo.
        for dd in range(9):
            d = deltas[dd]
            t = a1 if d == 0 else pltpu.roll(a1, shift=(-d) % S_pad, axis=1)
            g1_ref[dd * R1:(dd + 1) * R1, :] = t * mrow[dd]
        g1_ref[9 * R1:K1, :] = bias_blk                              # ones row carries the bias
        out1 = jnp.dot(w1_ref[...], g1_ref[...].astype(bf16),
                       preferred_element_type=f32)                   # (Co, S_pad), pad lanes exactly 0

        # ---- InstanceNorm(out1) + LeakyReLU(0.1) (per conv1 output channel) ----
        s2 = jnp.sum(out1, axis=-1, keepdims=True)                   # (Co, 1) exact f32
        q2 = jnp.sum(out1 * out1, axis=-1, keepdims=True)
        mu2 = s2 * inv2
        var2 = q2 * inv2 - mu2 * mu2
        a2 = (out1 - mu2) * lax.rsqrt(var2 + _EPS)
        a2 = jnp.where(a2 >= 0, a2, _SLOPE * a2)

        # ---- conv2: 3x3 / stride 1 / pad 1, same stacked-tap single matmul ----
        for dd in range(9):
            d = deltas[dd]
            t = a2 if d == 0 else pltpu.roll(a2, shift=(-d) % S_pad, axis=1)
            g2_ref[dd * Co:(dd + 1) * Co, :] = t * mrow[dd]
        g2_ref[9 * Co:K2, :] = bias_blk
        out_ref[...] = jnp.dot(w2_ref[...], g2_ref[...].astype(bf16),
                               preferred_element_type=f32)           # lane-dense (Co, S_pad) store

    return kernel


@jax.jit
def encoder_block_forward(x, params):
    """x: (N, C, H, W) f32 NCHW -> (N, Co, H//2, W//2).  Whole EncoderBlock = one pallas_call."""
    N, C, H, W = x.shape
    assert H % 2 == 0 and W % 2 == 0
    w1, b1, w2, b2 = params["w1"], params["b1"], params["w2"], params["b2"]
    Co = w1.shape[0]
    Hh, Wh = H // 2, W // 2
    S = Hh * Wh
    S_pad = ((S + 127) // 128) * 128
    R1 = 4 * C
    K1 = 9 * R1 + 8
    K2 = 9 * Co + 8

    # One API-boundary layout transform: 2x2 space-to-depth, per-image pixel axis on the lanes,
    # padded to a multiple of 128.  row = (p*2+q)*C + c, col = n*S_pad + i*Wh + j.
    xs = x.reshape(N, C, Hh, 2, Wh, 2).transpose(3, 5, 1, 0, 2, 4).reshape(R1, N, S)
    xs = jnp.pad(xs, ((0, 0), (0, 0), (0, S_pad - S))).reshape(R1, N * S_pad)

    # conv1 weights regrouped per spatial shift (di, dj); bias folded in as an extra column.
    w1dd = jnp.zeros((Co, 9, R1), w1.dtype)
    for ki in range(4):
        di, p = _DI[ki], _PP[ki]
        for kj in range(4):
            dj, q = _DI[kj], _PP[kj]
            dd = (di + 1) * 3 + (dj + 1)
            pq = p * 2 + q
            w1dd = w1dd.at[:, dd, pq * C:(pq + 1) * C].set(w1[:, :, ki, kj])
    w1_aug = jnp.concatenate(
        [w1dd.reshape(Co, 9 * R1), b1.reshape(Co, 1), jnp.zeros((Co, 7), w1.dtype)],
        axis=1).astype(jnp.bfloat16)                                  # (Co, K1) bf16

    # conv2 weights in natural (Co, Ci) blocks per shift (shift index == ki*3 + kj), bias folded.
    w2_aug = jnp.concatenate(
        [jnp.transpose(w2, (0, 2, 3, 1)).reshape(Co, 9 * Co), b2.reshape(Co, 1),
         jnp.zeros((Co, 7), w2.dtype)],
        axis=1).astype(jnp.bfloat16)                                  # (Co, K2) bf16

    masks = jnp.asarray(_build_masks(Hh, Wh, S, S_pad))               # (24, S_pad) constant
    gmat = jnp.asarray(_build_group_mat(C))                           # (R1, R1) constant

    kernel = _make_encoder_kernel(C, Co, Wh, S, S_pad)
    out = pl.pallas_call(
        kernel,
        out_shape=jax.ShapeDtypeStruct((Co, N * S_pad), jnp.float32),
        grid=(N,),
        in_specs=[
            pl.BlockSpec((R1, S_pad), lambda n: (0, n)),              # this image's pixels
            pl.BlockSpec((Co, K1), lambda n: (0, 0)),                 # weights stay resident
            pl.BlockSpec((Co, K2), lambda n: (0, 0)),
            pl.BlockSpec((24, S_pad), lambda n: (0, 0)),              # boundary / bias masks
            pl.BlockSpec((R1, R1), lambda n: (0, 0)),                 # channel-group indicator
        ],
        out_specs=pl.BlockSpec((Co, S_pad), lambda n: (0, n)),
        scratch_shapes=[
            pltpu.VMEM((K1, S_pad), jnp.float32),                     # stacked conv1 taps
            pltpu.VMEM((K2, S_pad), jnp.float32),                     # stacked conv2 taps
        ],
        compiler_params=pltpu.CompilerParams(dimension_semantics=("parallel",)),
    )(xs, w1_aug, w2_aug, masks, gmat)

    # API-boundary layout back to NCHW; drop the lane padding.
    out = out.reshape(Co, N, S_pad)[:, :, :S].reshape(Co, N, Hh, Wh)
    return jnp.transpose(out, (1, 0, 2, 3))


# ---------------------------------------------------------------------------
# Pure-JAX reference (verification only; exact f32 convolutions)
# ---------------------------------------------------------------------------

@jax.jit
def _reference_forward(x, params):
    def inorm(v):
        m = jnp.mean(v, axis=(2, 3), keepdims=True)
        var = jnp.mean((v - m) ** 2, axis=(2, 3), keepdims=True)
        return (v - m) * lax.rsqrt(var + _EPS)

    def lrelu(v):
        return jnp.where(v >= 0, v, _SLOPE * v)

    def conv(v, w, b, stride, pad):
        o = lax.conv_general_dilated(
            v, w, window_strides=(stride, stride), padding=[(pad, pad), (pad, pad)],
            dimension_numbers=("NCHW", "OIHW", "NCHW"), precision=lax.Precision.HIGHEST)
        return o + b.reshape(1, -1, 1, 1)

    out = conv(lrelu(inorm(x)), params["w1"], params["b1"], 2, 1)
    out = conv(lrelu(inorm(out)), params["w2"], params["b2"], 1, 1)
    return out


# ---------------------------------------------------------------------------
# Main
# ---------------------------------------------------------------------------

if __name__ == "__main__":
    input_nc, output_nc = 4, 8
    N, H, W = 2, 16, 16

    key = jax.random.PRNGKey(0)
    kx, kw1, kb1, kw2, kb2 = jax.random.split(key, 5)

    x = jax.random.normal(kx, (N, input_nc, H, W), dtype=jnp.float32)
    params = {
        "w1": jax.random.normal(kw1, (output_nc, input_nc, 4, 4), dtype=jnp.float32) * 0.1,
        "b1": jax.random.normal(kb1, (output_nc,), dtype=jnp.float32) * 0.1,
        "w2": jax.random.normal(kw2, (output_nc, output_nc, 3, 3), dtype=jnp.float32) * 0.1,
        "b2": jax.random.normal(kb2, (output_nc,), dtype=jnp.float32) * 0.1,
    }

    out = jax.block_until_ready(encoder_block_forward(x, params))
    ref = jax.block_until_ready(_reference_forward(x, params))

    assert out.shape == (N, output_nc, H // 2, W // 2), out.shape
    max_err = float(jnp.max(jnp.abs(out - ref)))
    # The kernel's two convolutions run with bf16 MXU operands (f32 accumulation) per the perf
    # guidance, while the reference uses exact-f32 convolutions; across the two stacked
    # contractions (depths 152 / 80) the expected worst-case deviation is ~1e-2, well below this
    # bound, whereas any real shift/mask/normalization bug produces O(1) errors.
    assert bool(jnp.allclose(out, ref, atol=3e-2, rtol=3e-2)), max_err

    print("KERNEL_OK")
</pallas_src>

<mosaic_0001>
module attributes {stable_mosaic.version = 11 : i64} {
  func.func @kernel(%arg0: i32, %arg1: memref<16x128xf32, #tpu.memory_space<vmem>>, %arg2: memref<8x152xbf16, #tpu.memory_space<vmem>>, %arg3: memref<8x80xbf16, #tpu.memory_space<vmem>>, %arg4: memref<24x128xf32, #tpu.memory_space<vmem>>, %arg5: memref<16x16xf32, #tpu.memory_space<vmem>>, %arg6: memref<8x128xf32, #tpu.memory_space<vmem>>, %arg7: memref<152x128xf32, #tpu.memory_space<vmem>>, %arg8: memref<80x128xf32, #tpu.memory_space<vmem>>) attributes {dimension_semantics = [#tpu.dimension_semantics<parallel>], iteration_bounds = array<i64: 2>, scalar_prefetch = 0 : i64, scratch_operands = 2 : i64, tpu.core_type = #tpu.core_type<tc>, window_params = [{transform_indices = @transform_0, window_bounds = array<i64: 16, 128>}, {pipeline_mode = #tpu.pipeline_mode<synchronous>, transform_indices = @transform_1, window_bounds = array<i64: 8, 152>}, {pipeline_mode = #tpu.pipeline_mode<synchronous>, transform_indices = @transform_2, window_bounds = array<i64: 8, 80>}, {pipeline_mode = #tpu.pipeline_mode<synchronous>, transform_indices = @transform_3, window_bounds = array<i64: 24, 128>}, {pipeline_mode = #tpu.pipeline_mode<synchronous>, transform_indices = @transform_4, window_bounds = array<i64: 16, 16>}, {transform_indices = @transform_5, window_bounds = array<i64: 8, 128>}]} {
    %c0 = arith.constant 0 : index
    %c0_0 = arith.constant 0 : index
    %0 = vector.load %arg1[%c0, %c0_0] : memref<16x128xf32, #tpu.memory_space<vmem>>, vector<16x128xf32>
    %c0_1 = arith.constant 0 : index
    %c0_2 = arith.constant 0 : index
    %1 = vector.load %arg4[%c0_1, %c0_2] : memref<24x128xf32, #tpu.memory_space<vmem>>, vector<1x128xf32>
    %c1 = arith.constant 1 : index
    %c0_3 = arith.constant 0 : index
    %2 = vector.load %arg4[%c1, %c0_3] : memref<24x128xf32, #tpu.memory_space<vmem>>, vector<1x128xf32>
    %c2 = arith.constant 2 : index
    %c0_4 = arith.constant 0 : index
    %3 = vector.load %arg4[%c2, %c0_4] : memref<24x128xf32, #tpu.memory_space<vmem>>, vector<1x128xf32>
    %c3 = arith.constant 3 : index
    %c0_5 = arith.constant 0 : index
    %4 = vector.load %arg4[%c3, %c0_5] : memref<24x128xf32, #tpu.memory_space<vmem>>, vector<1x128xf32>
    %c4 = arith.constant 4 : index
    %c0_6 = arith.constant 0 : index
    %5 = vector.load %arg4[%c4, %c0_6] : memref<24x128xf32, #tpu.memory_space<vmem>>, vector<1x128xf32>
    %c5 = arith.constant 5 : index
    %c0_7 = arith.constant 0 : index
    %6 = vector.load %arg4[%c5, %c0_7] : memref<24x128xf32, #tpu.memory_space<vmem>>, vector<1x128xf32>
    %c6 = arith.constant 6 : index
    %c0_8 = arith.constant 0 : index
    %7 = vector.load %arg4[%c6, %c0_8] : memref<24x128xf32, #tpu.memory_space<vmem>>, vector<1x128xf32>
    %c7 = arith.constant 7 : index
    %c0_9 = arith.constant 0 : index
    %8 = vector.load %arg4[%c7, %c0_9] : memref<24x128xf32, #tpu.memory_space<vmem>>, vector<1x128xf32>
    %c8 = arith.constant 8 : index
    %c0_10 = arith.constant 0 : index
    %9 = vector.load %arg4[%c8, %c0_10] : memref<24x128xf32, #tpu.memory_space<vmem>>, vector<1x128xf32>
    %c16 = arith.constant 16 : index
    %c0_11 = arith.constant 0 : index
    %10 = vector.load %arg4[%c16, %c0_11] : memref<24x128xf32, #tpu.memory_space<vmem>>, vector<8x128xf32>
    %cst = arith.constant dense<0.000000e+00> : vector<16xf32>
    %11 = vector.multi_reduction <add>, %0, %cst [1] : vector<16x128xf32> to vector<16xf32>
    %12 = vector.shape_cast %11 : vector<16xf32> to vector<16x1xf32>
    %13 = arith.mulf %0, %0 : vector<16x128xf32>
    %cst_12 = arith.constant dense<0.000000e+00> : vector<16xf32>
    %14 = vector.multi_reduction <add>, %13, %cst_12 [1] : vector<16x128xf32> to vector<16xf32>
    %15 = vector.shape_cast %14 : vector<16xf32> to vector<16x1xf32>
    %c0_13 = arith.constant 0 : index
    %c0_14 = arith.constant 0 : index
    %16 = vector.load %arg5[%c0_13, %c0_14] : memref<16x16xf32, #tpu.memory_space<vmem>>, vector<16x16xf32>
    %cst_15 = arith.constant dense<0.000000e+00> : vector<16x1xf32>
    %17 = tpu.matmul %16, %12, %cst_15 {dimension_numbers = #tpu.dot_dimension_numbers<[1], [0], [0], [1], [0, 0, 1, 1], [], []>} : vector<16x16xf32>, vector<16x1xf32>, vector<16x1xf32> -> vector<16x1xf32>
    %c0_16 = arith.constant 0 : index
    %c0_17 = arith.constant 0 : index
    %18 = vector.load %arg5[%c0_16, %c0_17] : memref<16x16xf32, #tpu.memory_space<vmem>>, vector<16x16xf32>
    %cst_18 = arith.constant dense<0.000000e+00> : vector<16x1xf32>
    %19 = tpu.matmul %18, %15, %cst_18 {dimension_numbers = #tpu.dot_dimension_numbers<[1], [0], [0], [1], [0, 0, 1, 1], [], []>} : vector<16x16xf32>, vector<16x1xf32>, vector<16x1xf32> -> vector<16x1xf32>
    %cst_19 = arith.constant 3.906250e-03 : f32
    %20 = vector.broadcast %cst_19 : f32 to vector<16x1xf32>
    %21 = arith.mulf %17, %20 : vector<16x1xf32>
    %cst_20 = arith.constant 3.906250e-03 : f32
    %22 = vector.broadcast %cst_20 : f32 to vector<16x1xf32>
    %23 = arith.mulf %19, %22 : vector<16x1xf32>
    %24 = arith.mulf %21, %21 : vector<16x1xf32>
    %25 = arith.subf %23, %24 : vector<16x1xf32>
    %26 = vector.broadcast %21 : vector<16x1xf32> to vector<16x128xf32>
    %27 = arith.subf %0, %26 : vector<16x128xf32>
    %cst_21 = arith.constant 9.99999974E-6 : f32
    %28 = vector.broadcast %cst_21 : f32 to vector<16x1xf32>
    %29 = arith.addf %25, %28 : vector<16x1xf32>
    %30 = math.rsqrt %29 : vector<16x1xf32>
    %31 = vector.broadcast %30 : vector<16x1xf32> to vector<16x128xf32>
    %32 = arith.mulf %27, %31 : vector<16x128xf32>
    %cst_22 = arith.constant 0.000000e+00 : f32
    %33 = vector.broadcast %cst_22 : f32 to vector<16x128xf32>
    %34 = arith.cmpf oge, %32, %33 : vector<16x128xf32>
    %cst_23 = arith.constant 1.000000e-01 : f32
    %35 = vector.broadcast %cst_23 : f32 to vector<16x128xf32>
    %36 = arith.mulf %35, %32 : vector<16x128xf32>
    %37 = arith.select %34, %32, %36 : vector<16x128xi1>, vector<16x128xf32>
    %c9_i32 = arith.constant 9 : i32
    %38 = tpu.dynamic_rotate %37 by %c9_i32 dim 1 : vector<16x128xf32>, i32 -> vector<16x128xf32>
    %39 = vector.broadcast %1 : vector<1x128xf32> to vector<16x128xf32>
    %40 = arith.mulf %38, %39 : vector<16x128xf32>
    %c0_24 = arith.constant 0 : index
    %c0_25 = arith.constant 0 : index
    %41 = vector.load %arg7[%c0_24, %c0_25] : memref<152x128xf32, #tpu.memory_space<vmem>>, vector<16x128xf32>
    tpu.vector_store %arg7[%c0_24, %c0_25], %40 {strides = array<i32>} : memref<152x128xf32, #tpu.memory_space<vmem>>, vector<16x128xf32>,
    %c8_i32 = arith.constant 8 : i32
    %42 = tpu.dynamic_rotate %37 by %c8_i32 dim 1 : vector<16x128xf32>, i32 -> vector<16x128xf32>
    %43 = vector.broadcast %2 : vector<1x128xf32> to vector<16x128xf32>
    %44 = arith.mulf %42, %43 : vector<16x128xf32>
    %c16_26 = arith.constant 16 : index
    %c0_27 = arith.constant 0 : index
    %45 = vector.load %arg7[%c16_26, %c0_27] : memref<152x128xf32, #tpu.memory_space<vmem>>, vector<16x128xf32>
    tpu.vector_store %arg7[%c16_26, %c0_27], %44 {strides = array<i32>} : memref<152x128xf32, #tpu.memory_space<vmem>>, vector<16x128xf32>,
    %c7_i32 = arith.constant 7 : i32
    %46 = tpu.dynamic_rotate %37 by %c7_i32 dim 1 : vector<16x128xf32>, i32 -> vector<16x128xf32>
    %47 = vector.broadcast %3 : vector<1x128xf32> to vector<16x128xf32>
    %48 = arith.mulf %46, %47 : vector<16x128xf32>
    %c32 = arith.constant 32 : index
    %c0_28 = arith.constant 0 : index
    %49 = vector.load %arg7[%c32, %c0_28] : memref<152x128xf32, #tpu.memory_space<vmem>>, vector<16x128xf32>
    tpu.vector_store %arg7[%c32, %c0_28], %48 {strides = array<i32>} : memref<152x128xf32, #tpu.memory_space<vmem>>, vector<16x128xf32>,
    %c1_i32 = arith.constant 1 : i32
    %50 = tpu.dynamic_rotate %37 by %c1_i32 dim 1 : vector<16x128xf32>, i32 -> vector<16x128xf32>
    %51 = vector.broadcast %4 : vector<1x128xf32> to vector<16x128xf32>
    %52 = arith.mulf %50, %51 : vector<16x128xf32>
    %c48 = arith.constant 48 : index
    %c0_29 = arith.constant 0 : index
    %53 = vector.load %arg7[%c48, %c0_29] : memref<152x128xf32, #tpu.memory_space<vmem>>, vector<16x128xf32>
    tpu.vector_store %arg7[%c48, %c0_29], %52 {strides = array<i32>} : memref<152x128xf32, #tpu.memory_space<vmem>>, vector<16x128xf32>,
    %54 = vector.broadcast %5 : vector<1x128xf32> to vector<16x128xf32>
    %55 = arith.mulf %37, %54 : vector<16x128xf32>
    %c64 = arith.constant 64 : index
    %c0_30 = arith.constant 0 : index
    %56 = vector.load %arg7[%c64, %c0_30] : memref<152x128xf32, #tpu.memory_space<vmem>>, vector<16x128xf32>
    tpu.vector_store %arg7[%c64, %c0_30], %55 {strides = array<i32>} : memref<152x128xf32, #tpu.memory_space<vmem>>, vector<16x128xf32>,
    %c127_i32 = arith.constant 127 : i32
    %57 = tpu.dynamic_rotate %37 by %c127_i32 dim 1 : vector<16x128xf32>, i32 -> vector<16x128xf32>
    %58 = vector.broadcast %6 : vector<1x128xf32> to vector<16x128xf32>
    %59 = arith.mulf %57, %58 : vector<16x128xf32>
    %c80 = arith.constant 80 : index
    %c0_31 = arith.constant 0 : index
    %60 = vector.load %arg7[%c80, %c0_31] : memref<152x128xf32, #tpu.memory_space<vmem>>, vector<16x128xf32>
    tpu.vector_store %arg7[%c80, %c0_31], %59 {strides = array<i32>} : memref<152x128xf32, #tpu.memory_space<vmem>>, vector<16x128xf32>,
    %c121_i32 = arith.constant 121 : i32
    %61 = tpu.dynamic_rotate %37 by %c121_i32 dim 1 : vector<16x128xf32>, i32 -> vector<16x128xf32>
    %62 = vector.broadcast %7 : vector<1x128xf32> to vector<16x128xf32>
    %63 = arith.mulf %61, %62 : vector<16x128xf32>
    %c96 = arith.constant 96 : index
    %c0_32 = arith.constant 0 : index
    %64 = vector.load %arg7[%c96, %c0_32] : memref<152x128xf32, #tpu.memory_space<vmem>>, vector<16x128xf32>
    tpu.vector_store %arg7[%c96, %c0_32], %63 {strides = array<i32>} : memref<152x128xf32, #tpu.memory_space<vmem>>, vector<16x128xf32>,
    %c120_i32 = arith.constant 120 : i32
    %65 = tpu.dynamic_rotate %37 by %c120_i32 dim 1 : vector<16x128xf32>, i32 -> vector<16x128xf32>
    %66 = vector.broadcast %8 : vector<1x128xf32> to vector<16x128xf32>
    %67 = arith.mulf %65, %66 : vector<16x128xf32>
    %c112 = arith.constant 112 : index
    %c0_33 = arith.constant 0 : index
    %68 = vector.load %arg7[%c112, %c0_33] : memref<152x128xf32, #tpu.memory_space<vmem>>, vector<16x128xf32>
    tpu.vector_store %arg7[%c112, %c0_33], %67 {strides = array<i32>} : memref<152x128xf32, #tpu.memory_space<vmem>>, vector<16x128xf32>,
    %c119_i32 = arith.constant 119 : i32
    %69 = tpu.dynamic_rotate %37 by %c119_i32 dim 1 : vector<16x128xf32>, i32 -> vector<16x128xf32>
    %70 = vector.broadcast %9 : vector<1x128xf32> to vector<16x128xf32>
    %71 = arith.mulf %69, %70 : vector<16x128xf32>
    %c128 = arith.constant 128 : index
    %c0_34 = arith.constant 0 : index
    %72 = vector.load %arg7[%c128, %c0_34] : memref<152x128xf32, #tpu.memory_space<vmem>>, vector<16x128xf32>
    tpu.vector_store %arg7[%c128, %c0_34], %71 {strides = array<i32>} : memref<152x128xf32, #tpu.memory_space<vmem>>, vector<16x128xf32>,
    %c144 = arith.constant 144 : index
    %c0_35 = arith.constant 0 : index
    %73 = vector.load %arg7[%c144, %c0_35] : memref<152x128xf32, #tpu.memory_space<vmem>>, vector<8x128xf32>
    tpu.vector_store %arg7[%c144, %c0_35], %10 {strides = array<i32>} : memref<152x128xf32, #tpu.memory_space<vmem>>, vector<8x128xf32>,
    %c0_36 = arith.constant 0 : index
    %c0_37 = arith.constant 0 : index
    %74 = vector.load %arg2[%c0_36, %c0_37] : memref<8x152xbf16, #tpu.memory_space<vmem>>, vector<8x152xbf16>
    %c0_38 = arith.constant 0 : index
    %c0_39 = arith.constant 0 : index
    %75 = vector.load %arg7[%c0_38, %c0_39] : memref<152x128xf32, #tpu.memory_space<vmem>>, vector<152x128xf32>
    %76 = arith.truncf %75 : vector<152x128xf32> to vector<152x128xbf16>
    %cst_40 = arith.constant dense<0.000000e+00> : vector<8x128xf32>
    %77 = tpu.matmul %74, %76, %cst_40 {dimension_numbers = #tpu.dot_dimension_numbers<[1], [0], [0], [1], [0, 0, 1, 1], [], []>} : vector<8x152xbf16>, vector<152x128xbf16>, vector<8x128xf32> -> vector<8x128xf32>
    %cst_41 = arith.constant dense<0.000000e+00> : vector<8xf32>
    %78 = vector.multi_reduction <add>, %77, %cst_41 [1] : vector<8x128xf32> to vector<8xf32>
    %79 = vector.shape_cast %78 : vector<8xf32> to vector<8x1xf32>
    %80 = arith.mulf %77, %77 : vector<8x128xf32>
    %cst_42 = arith.constant dense<0.000000e+00> : vector<8xf32>
    %81 = vector.multi_reduction <add>, %80, %cst_42 [1] : vector<8x128xf32> to vector<8xf32>
    %82 = vector.shape_cast %81 : vector<8xf32> to vector<8x1xf32>
    %cst_43 = arith.constant 1.562500e-02 : f32
    %83 = vector.broadcast %cst_43 : f32 to vector<8x1xf32>
    %84 = arith.mulf %79, %83 : vector<8x1xf32>
    %cst_44 = arith.constant 1.562500e-02 : f32
    %85 = vector.broadcast %cst_44 : f32 to vector<8x1xf32>
    %86 = arith.mulf %82, %85 : vector<8x1xf32>
    %87 = arith.mulf %84, %84 : vector<8x1xf32>
    %88 = arith.subf %86, %87 : vector<8x1xf32>
    %89 = vector.broadcast %84 : vector<8x1xf32> to vector<8x128xf32>
    %90 = arith.subf %77, %89 : vector<8x128xf32>
    %cst_45 = arith.constant 9.99999974E-6 : f32
    %91 = vector.broadcast %cst_45 : f32 to vector<8x1xf32>
    %92 = arith.addf %88, %91 : vector<8x1xf32>
    %93 = math.rsqrt %92 : vector<8x1xf32>
    %94 = vector.broadcast %93 : vector<8x1xf32> to vector<8x128xf32>
    %95 = arith.mulf %90, %94 : vector<8x128xf32>
    %cst_46 = arith.constant 0.000000e+00 : f32
    %96 = vector.broadcast %cst_46 : f32 to vector<8x128xf32>
    %97 = arith.cmpf oge, %95, %96 : vector<8x128xf32>
    %cst_47 = arith.constant 1.000000e-01 : f32
    %98 = vector.broadcast %cst_47 : f32 to vector<8x128xf32>
    %99 = arith.mulf %98, %95 : vector<8x128xf32>
    %100 = arith.select %97, %95, %99 : vector<8x128xi1>, vector<8x128xf32>
    %c9_i32_48 = arith.constant 9 : i32
    %101 = tpu.dynamic_rotate %100 by %c9_i32_48 dim 1 : vector<8x128xf32>, i32 -> vector<8x128xf32>
    %102 = vector.broadcast %1 : vector<1x128xf32> to vector<8x128xf32>
    %103 = arith.mulf %101, %102 : vector<8x128xf32>
    %c0_49 = arith.constant 0 : index
    %c0_50 = arith.constant 0 : index
    %104 = vector.load %arg8[%c0_49, %c0_50] : memref<80x128xf32, #tpu.memory_space<vmem>>, vector<8x128xf32>
    tpu.vector_store %arg8[%c0_49, %c0_50], %103 {strides = array<i32>} : memref<80x128xf32, #tpu.memory_space<vmem>>, vector<8x128xf32>,
    %c8_i32_51 = arith.constant 8 : i32
    %105 = tpu.dynamic_rotate %100 by %c8_i32_51 dim 1 : vector<8x128xf32>, i32 -> vector<8x128xf32>
    %106 = vector.broadcast %2 : vector<1x128xf32> to vector<8x128xf32>
    %107 = arith.mulf %105, %106 : vector<8x128xf32>
    %c8_52 = arith.constant 8 : index
    %c0_53 = arith.constant 0 : index
    %108 = vector.load %arg8[%c8_52, %c0_53] : memref<80x128xf32, #tpu.memory_space<vmem>>, vector<8x128xf32>
    tpu.vector_store %arg8[%c8_52, %c0_53], %107 {strides = array<i32>} : memref<80x128xf32, #tpu.memory_space<vmem>>, vector<8x128xf32>,
    %c7_i32_54 = arith.constant 7 : i32
    %109 = tpu.dynamic_rotate %100 by %c7_i32_54 dim 1 : vector<8x128xf32>, i32 -> vector<8x128xf32>
    %110 = vector.broadcast %3 : vector<1x128xf32> to vector<8x128xf32>
    %111 = arith.mulf %109, %110 : vector<8x128xf32>
    %c16_55 = arith.constant 16 : index
    %c0_56 = arith.constant 0 : index
    %112 = vector.load %arg8[%c16_55, %c0_56] : memref<80x128xf32, #tpu.memory_space<vmem>>, vector<8x128xf32>
    tpu.vector_store %arg8[%c16_55, %c0_56], %111 {strides = array<i32>} : memref<80x128xf32, #tpu.memory_space<vmem>>, vector<8x128xf32>,
    %c1_i32_57 = arith.constant 1 : i32
    %113 = tpu.dynamic_rotate %100 by %c1_i32_57 dim 1 : vector<8x128xf32>, i32 -> vector<8x128xf32>
    %114 = vector.broadcast %4 : vector<1x128xf32> to vector<8x128xf32>
    %115 = arith.mulf %113, %114 : vector<8x128xf32>
    %c24 = arith.constant 24 : index
    %c0_58 = arith.constant 0 : index
    %116 = vector.load %arg8[%c24, %c0_58] : memref<80x128xf32, #tpu.memory_space<vmem>>, vector<8x128xf32>
    tpu.vector_store %arg8[%c24, %c0_58], %115 {strides = array<i32>} : memref<80x128xf32, #tpu.memory_space<vmem>>, vector<8x128xf32>,
    %117 = vector.broadcast %5 : vector<1x128xf32> to vector<8x128xf32>
    %118 = arith.mulf %100, %117 : vector<8x128xf32>
    %c32_59 = arith.constant 32 : index
    %c0_60 = arith.constant 0 : index
    %119 = vector.load %arg8[%c32_59, %c0_60] : memref<80x128xf32, #tpu.memory_space<vmem>>, vector<8x128xf32>
    tpu.vector_store %arg8[%c32_59, %c0_60], %118 {strides = array<i32>} : memref<80x128xf32, #tpu.memory_space<vmem>>, vector<8x128xf32>,
    %c127_i32_61 = arith.constant 127 : i32
    %120 = tpu.dynamic_rotate %100 by %c127_i32_61 dim 1 : vector<8x128xf32>, i32 -> vector<8x128xf32>
    %121 = vector.broadcast %6 : vector<1x128xf32> to vector<8x128xf32>
    %122 = arith.mulf %120, %121 : vector<8x128xf32>
    %c40 = arith.constant 40 : index
    %c0_62 = arith.constant 0 : index
    %123 = vector.load %arg8[%c40, %c0_62] : memref<80x128xf32, #tpu.memory_space<vmem>>, vector<8x128xf32>
    tpu.vector_store %arg8[%c40, %c0_62], %122 {strides = array<i32>} : memref<80x128xf32, #tpu.memory_space<vmem>>, vector<8x128xf32>,
    %c121_i32_63 = arith.constant 121 : i32
    %124 = tpu.dynamic_rotate %100 by %c121_i32_63 dim 1 : vector<8x128xf32>, i32 -> vector<8x128xf32>
    %125 = vector.broadcast %7 : vector<1x128xf32> to vector<8x128xf32>
    %126 = arith.mulf %124, %125 : vector<8x128xf32>
    %c48_64 = arith.constant 48 : index
    %c0_65 = arith.constant 0 : index
    %127 = vector.load %arg8[%c48_64, %c0_65] : memref<80x128xf32, #tpu.memory_space<vmem>>, vector<8x128xf32>
    tpu.vector_store %arg8[%c48_64, %c0_65], %126 {strides = array<i32>} : memref<80x128xf32, #tpu.memory_space<vmem>>, vector<8x128xf32>,
    %c120_i32_66 = arith.constant 120 : i32
    %128 = tpu.dynamic_rotate %100 by %c120_i32_66 dim 1 : vector<8x128xf32>, i32 -> vector<8x128xf32>
    %129 = vector.broadcast %8 : vector<1x128xf32> to vector<8x128xf32>
    %130 = arith.mulf %128, %129 : vector<8x128xf32>
    %c56 = arith.constant 56 : index
    %c0_67 = arith.constant 0 : index
    %131 = vector.load %arg8[%c56, %c0_67] : memref<80x128xf32, #tpu.memory_space<vmem>>, vector<8x128xf32>
    tpu.vector_store %arg8[%c56, %c0_67], %130 {strides = array<i32>} : memref<80x128xf32, #tpu.memory_space<vmem>>, vector<8x128xf32>,
    %c119_i32_68 = arith.constant 119 : i32
    %132 = tpu.dynamic_rotate %100 by %c119_i32_68 dim 1 : vector<8x128xf32>, i32 -> vector<8x128xf32>
    %133 = vector.broadcast %9 : vector<1x128xf32> to vector<8x128xf32>
    %134 = arith.mulf %132, %133 : vector<8x128xf32>
    %c64_69 = arith.constant 64 : index
    %c0_70 = arith.constant 0 : index
    %135 = vector.load %arg8[%c64_69, %c0_70] : memref<80x128xf32, #tpu.memory_space<vmem>>, vector<8x128xf32>
    tpu.vector_store %arg8[%c64_69, %c0_70], %134 {strides = array<i32>} : memref<80x128xf32, #tpu.memory_space<vmem>>, vector<8x128xf32>,
    %c72 = arith.constant 72 : index
    %c0_71 = arith.constant 0 : index
    %136 = vector.load %arg8[%c72, %c0_71] : memref<80x128xf32, #tpu.memory_space<vmem>>, vector<8x128xf32>
    tpu.vector_store %arg8[%c72, %c0_71], %10 {strides = array<i32>} : memref<80x128xf32, #tpu.memory_space<vmem>>, vector<8x128xf32>,
    %c0_72 = arith.constant 0 : index
    %c0_73 = arith.constant 0 : index
    %137 = vector.load %arg3[%c0_72, %c0_73] : memref<8x80xbf16, #tpu.memory_space<vmem>>, vector<8x80xbf16>
    %c0_74 = arith.constant 0 : index
    %c0_75 = arith.constant 0 : index
    %138 = vector.load %arg8[%c0_74, %c0_75] : memref<80x128xf32, #tpu.memory_space<vmem>>, vector<80x128xf32>
    %139 = arith.truncf %138 : vector<80x128xf32> to vector<80x128xbf16>
    %cst_76 = arith.constant dense<0.000000e+00> : vector<8x128xf32>
    %140 = tpu.matmul %137, %139, %cst_76 {dimension_numbers = #tpu.dot_dimension_numbers<[1], [0], [0], [1], [0, 0, 1, 1], [], []>} : vector<8x80xbf16>, vector<80x128xbf16>, vector<8x128xf32> -> vector<8x128xf32>
    %c0_77 = arith.constant 0 : index
    %c0_78 = arith.constant 0 : index
    %141 = vector.load %arg6[%c0_77, %c0_78] : memref<8x128xf32, #tpu.memory_space<vmem>>, vector<8x128xf32>
    tpu.vector_store %arg6[%c0_77, %c0_78], %140 {strides = array<i32>} : memref<8x128xf32, #tpu.memory_space<vmem>>, vector<8x128xf32>,
    return
  }
  func.func @transform_0(%arg0: i32) -> (i32, i32) {
    %c0_i32 = arith.constant 0 : i32
    %c0_i32_0 = arith.constant 0 : i32
    return %c0_i32, %arg0 : i32, i32
  }
  func.func @transform_1(%arg0: i32) -> (i32, i32) {
    %c0_i32 = arith.constant 0 : i32
    %c0_i32_0 = arith.constant 0 : i32
    %c0_i32_1 = arith.constant 0 : i32
    return %c0_i32, %c0_i32_0 : i32, i32
  }
  func.func @transform_2(%arg0: i32) -> (i32, i32) {
    %c0_i32 = arith.constant 0 : i32
    %c0_i32_0 = arith.constant 0 : i32
    %c0_i32_1 = arith.constant 0 : i32
    return %c0_i32, %c0_i32_0 : i32, i32
  }
  func.func @transform_3(%arg0: i32) -> (i32, i32) {
    %c0_i32 = arith.constant 0 : i32
    %c0_i32_0 = arith.constant 0 : i32
    %c0_i32_1 = arith.constant 0 : i32
    return %c0_i32, %c0_i32_0 : i32, i32
  }
  func.func @transform_4(%arg0: i32) -> (i32, i32) {
    %c0_i32 = arith.constant 0 : i32
    %c0_i32_0 = arith.constant 0 : i32
    %c0_i32_1 = arith.constant 0 : i32
    return %c0_i32, %c0_i32_0 : i32, i32
  }
  func.func @transform_5(%arg0: i32) -> (i32, i32) {
    %c0_i32 = arith.constant 0 : i32
    %c0_i32_0 = arith.constant 0 : i32
    return %c0_i32, %arg0 : i32, i32
  }
}

</mosaic_0001>

<llo_original>
// kernel: encoder_block_forward.1
$region0: #{encoder_block_forward.1}
  #allocation0 [shape = 'u32[]', space=smem, size = 0x4, offset = 0x4, fixed_abs, tag = 'smem constant byte address 0x4 - core index']
  #allocation1 [shape = 'u32[144,128]{1,0:T(1,128)}', space=vmem, size = 0x12000, scoped, tag = 'internal scratch']
  #allocation2 [shape = 'f32[152,128]{1,0:T(8,128)}', space=vmem, size = 0x13000, scoped, tag = 'scratch operand']
  #allocation3 [shape = 'f32[80,128]{1,0:T(8,128)}', space=vmem, size = 0xa000, scoped, tag = 'scratch operand']
  %s0 = inlined_call_operand.vmem [shape: f32[16,256], index: 0, kind: input, shape index: {}]
  %s1 = inlined_call_operand.vmem [shape: bf16[8,152], index: 1, kind: input, shape index: {}]
  %s2 = inlined_call_operand.vmem [shape: bf16[8,80], index: 2, kind: input, shape index: {}]
  %s3 = inlined_call_operand.vmem [shape: f32[24,128], index: 3, kind: input, shape index: {}]
  %s4 = inlined_call_operand.vmem [shape: f32[16,16], index: 4, kind: input, shape index: {}]
  %s5 = inlined_call_operand.vmem [shape: f32[8,256], index: 5, kind: output, shape index: {}]
  %s6 = sld [smem:[#allocation0]]
  $region91: #{encoder_block_forward.1} parent=0
    _
  %s8 = ssub.s32 1, %s6
  %s9 = scalar_select 0, %s8, %s6
  $region1: #{encoder_block_forward.1} parent=0
    #allocation4 [shape = 'u8[16384]{0}', space=vmem, size = 0x4000, scoped, tag = 'input window, operand 0']
    loop: start=0, step=1, limit=4
    $region2: #{encoder_block_forward.1} parent=1 // loop_pre_header
      _
    $region3: #{encoder_block_forward.1} parent=1 // loop_header
      %s11 = sphi 0, %s15
      %p12 = scmp.ge.s32.totalorder %s11, 4
      %s21 = sphi 0, %s23
      %s24 = sphi 0, %s21
      %s25 = sphi 0, %s24
      %s41 = sphi 0, %s25
      %s45 = sphi 0, %s45
      %s47 = sphi 0, %s45
      %s48 = sphi 0, %s47
      %s62 = sphi 0, %s48
      %s66 = sphi 0, %s66
      %s68 = sphi 0, %s66
      %s69 = sphi 0, %s68
      %s83 = sphi 0, %s69
      %s87 = sphi 0, %s87
      %s89 = sphi 0, %s87
      %s90 = sphi 0, %s89
      %s104 = sphi 0, %s90
      %s108 = sphi 0, %s108
      %s110 = sphi 0, %s108
      %s111 = sphi 0, %s110
      %s125 = sphi 0, %s111
      %s131 = sphi 0, %s133
      %s134 = sphi 0, %s131
      %s135 = sphi 0, %s134
      %s151 = sphi 0, %s135
    $region4: #{encoder_block_forward.1} parent=1 // loop_header_branch
      %14 = sbr.rel (%p12) target = $region8
    $region5: #{encoder_block_forward.1} parent=1 // loop_body
      %s16 = ssub.s32 %s11, 1
      %s17 = ssub.s32 %s11, 2
      %s18 = sadd.s32 %s11, 1
      %s19 = ssub.s32 %s11, %s18
      %p20 = scmp.eq.s32.totalorder %s19, 0
      %s22 = sadd.s32 %s21, 1
      %s23 = scalar_select %p20, %s21, %s22
      %p26 = pneg %p20
      %p27 = scmp.eq.s32.totalorder %s11, 1
      %p28 = por %p26, %p27
      %p29 = scmp.ne.s32.totalorder %s21, %s24
      %p30 = scmp.eq.s32.totalorder %s11, 0
      %p31 = por %p29, %p30
      %p32 = scmp.ne.s32.totalorder %s21, %s24
      %p33 = scmp.eq.s32.totalorder %s16, 1
      %p34 = por %p32, %p33
      %p35 = scmp.ne.s32.totalorder %s24, %s25
      %p36 = scmp.eq.s32.totalorder %s16, 0
      %p37 = por %p35, %p36
      %p38 = scmp.ne.s32.totalorder %s24, %s25
      %p39 = scmp.eq.s32.totalorder %s17, 1
      %p40 = por %p38, %p39
      %p42 = scmp.ne.s32.totalorder %s25, %s41
      %p43 = scmp.eq.s32.totalorder %s17, 0
      %p44 = por %p42, %p43
      %s46 = sadd.s32 %s45, 1
      %p49 = scmp.eq.s32.totalorder %s11, 1
      %p50 = scmp.ne.s32.totalorder %s45, %s47
      %p51 = scmp.eq.s32.totalorder %s11, 0
      %p52 = por %p50, %p51
      %p53 = scmp.ne.s32.totalorder %s45, %s47
      %p54 = scmp.eq.s32.totalorder %s16, 1
      %p55 = por %p53, %p54
      %p56 = scmp.ne.s32.totalorder %s47, %s48
      %p57 = scmp.eq.s32.totalorder %s16, 0
      %p58 = por %p56, %p57
      %p59 = scmp.ne.s32.totalorder %s47, %s48
      %p60 = scmp.eq.s32.totalorder %s17, 1
      %p61 = por %p59, %p60
      %p63 = scmp.ne.s32.totalorder %s48, %s62
      %p64 = scmp.eq.s32.totalorder %s17, 0
      %p65 = por %p63, %p64
      %s67 = sadd.s32 %s66, 1
      %p70 = scmp.eq.s32.totalorder %s11, 1
      %p71 = scmp.ne.s32.totalorder %s66, %s68
      %p72 = scmp.eq.s32.totalorder %s11, 0
      %p73 = por %p71, %p72
      %p74 = scmp.ne.s32.totalorder %s66, %s68
      %p75 = scmp.eq.s32.totalorder %s16, 1
      %p76 = por %p74, %p75
      %p77 = scmp.ne.s32.totalorder %s68, %s69
      %p78 = scmp.eq.s32.totalorder %s16, 0
      %p79 = por %p77, %p78
      %p80 = scmp.ne.s32.totalorder %s68, %s69
      %p81 = scmp.eq.s32.totalorder %s17, 1
      %p82 = por %p80, %p81
      %p84 = scmp.ne.s32.totalorder %s69, %s83
      %p85 = scmp.eq.s32.totalorder %s17, 0
      %p86 = por %p84, %p85
      %s88 = sadd.s32 %s87, 1
      %p91 = scmp.eq.s32.totalorder %s11, 1
      %p92 = scmp.ne.s32.totalorder %s87, %s89
      %p93 = scmp.eq.s32.totalorder %s11, 0
      %p94 = por %p92, %p93
      %p95 = scmp.ne.s32.totalorder %s87, %s89
      %p96 = scmp.eq.s32.totalorder %s16, 1
      %p97 = por %p95, %p96
      %p98 = scmp.ne.s32.totalorder %s89, %s90
      %p99 = scmp.eq.s32.totalorder %s16, 0
      %p100 = por %p98, %p99
      %p101 = scmp.ne.s32.totalorder %s89, %s90
      %p102 = scmp.eq.s32.totalorder %s17, 1
      %p103 = por %p101, %p102
      %p105 = scmp.ne.s32.totalorder %s90, %s104
      %p106 = scmp.eq.s32.totalorder %s17, 0
      %p107 = por %p105, %p106
      %s109 = sadd.s32 %s108, 1
      %p112 = scmp.eq.s32.totalorder %s11, 1
      %p113 = scmp.ne.s32.totalorder %s108, %s110
      %p114 = scmp.eq.s32.totalorder %s11, 0
      %p115 = por %p113, %p114
      %p116 = scmp.ne.s32.totalorder %s108, %s110
      %p117 = scmp.eq.s32.totalorder %s16, 1
      %p118 = por %p116, %p117
      %p119 = scmp.ne.s32.totalorder %s110, %s111
      %p120 = scmp.eq.s32.totalorder %s16, 0
      %p121 = por %p119, %p120
      %p122 = scmp.ne.s32.totalorder %s110, %s111
      %p123 = scmp.eq.s32.totalorder %s17, 1
      %p124 = por %p122, %p123
      %p126 = scmp.ne.s32.totalorder %s111, %s125
      %p127 = scmp.eq.s32.totalorder %s17, 0
      %p128 = por %p126, %p127
      %s129 = ssub.s32 %s11, %s18
      %p130 = scmp.eq.s32.totalorder %s129, 0
      %s132 = sadd.s32 %s131, 1
      %s133 = scalar_select %p130, %s131, %s132
      %p136 = pneg %p130
      %p137 = scmp.eq.s32.totalorder %s11, 1
      %p138 = por %p136, %p137
      %p139 = scmp.ne.s32.totalorder %s131, %s134
      %p140 = scmp.eq.s32.totalorder %s11, 0
      %p141 = por %p139, %p140
      %p142 = scmp.ne.s32.totalorder %s131, %s134
      %p143 = scmp.eq.s32.totalorder %s16, 1
      %p144 = por %p142, %p143
      %p145 = scmp.ne.s32.totalorder %s134, %s135
      %p146 = scmp.eq.s32.totalorder %s16, 0
      %p147 = por %p145, %p146
      %p148 = scmp.ne.s32.totalorder %s134, %s135
      %p149 = scmp.eq.s32.totalorder %s17, 1
      %p150 = por %p148, %p149
      %p152 = scmp.ne.s32.totalorder %s135, %s151
      %p153 = scmp.eq.s32.totalorder %s17, 0
      %p154 = por %p152, %p153
      %p155 = scmp.le.s32.totalorder 1, %s11
      %p156 = scmp.lt.s32.totalorder %s11, 3
      %p157 = pnand %p155, %p156
      %p158 = pneg %p157
      // Predicated region
      $region9: #{encoder_block_forward.1} parent=5 // pred_check
        _
      $region10: #{encoder_block_forward.1} parent=5 // pred_check_branch
        %160 = sbr.rel (%p157) target = $region12
      $region11: #{encoder_block_forward.1} parent=5 // pred_region
        %s161 = ssub.s32 %s11, 1
        // Predicated region
        $region13: #{encoder_block_forward.1} parent=11 // pred_check
          %p162 = pneg %p58
        $region14: #{encoder_block_forward.1} parent=11 // pred_check_branch
          %164 = sbr.rel (%p162) target = $region16
        $region15: #{encoder_block_forward.1} parent=11 // pred_region
          _
        $region16: #{encoder_block_forward.1} parent=11 // pred_fallthru
          _
        // Predicated region
        $region17: #{encoder_block_forward.1} parent=11 // pred_check
          %p165 = pneg %p79
        $region18: #{encoder_block_forward.1} parent=11 // pred_check_branch
          %167 = sbr.rel (%p165) target = $region20
        $region19: #{encoder_block_forward.1} parent=11 // pred_region
          _
        $region20: #{encoder_block_forward.1} parent=11 // pred_fallthru
          _
        // Predicated region
        $region21: #{encoder_block_forward.1} parent=11 // pred_check
          %p168 = pneg %p100
        $region22: #{encoder_block_forward.1} parent=11 // pred_check_branch
          %170 = sbr.rel (%p168) target = $region24
        $region23: #{encoder_block_forward.1} parent=11 // pred_region
          _
        $region24: #{encoder_block_forward.1} parent=11 // pred_fallthru
          _
        // Predicated region
        $region25: #{encoder_block_forward.1} parent=11 // pred_check
          %p171 = pneg %p121
        $region26: #{encoder_block_forward.1} parent=11 // pred_check_branch
          %173 = sbr.rel (%p171) target = $region28
        $region27: #{encoder_block_forward.1} parent=11 // pred_region
          _
        $region28: #{encoder_block_forward.1} parent=11 // pred_fallthru
          _
      $region12: #{encoder_block_forward.1} parent=5 // pred_fallthru
        _
      %p174 = scmp.lt.s32.totalorder %s11, 2
      // Predicated region
      $region29: #{encoder_block_forward.1} parent=5 // pred_check
        %p175 = pneg %p174
      $region30: #{encoder_block_forward.1} parent=5 // pred_check_branch
        %177 = sbr.rel (%p175) target = $region32
      $region31: #{encoder_block_forward.1} parent=5 // pred_region
        // Predicated region
        $region33: #{encoder_block_forward.1} parent=31 // pred_check
          %p178 = pneg %p31
        $region34: #{encoder_block_forward.1} parent=31 // pred_check_branch
          %180 = sbr.rel (%p178) target = $region36
        $region35: #{encoder_block_forward.1} parent=31 // pred_region
          %s181 = sand.u32 %s21, 1
          %s182 = sand.u32 %s21, 1
          %s183 = smul.addr %s182, 16
          %s184 = scalar_lea.vmem [#allocation4], %s183
          %s185 = smul.addr %s11, 8
          %s186 = scalar_lea.vmem %s0, %s185
          // Predicated region
          $region37: #{encoder_block_forward.1} parent=35 // pred_check
            _
          $region38: #{encoder_block_forward.1} parent=35 // pred_check_branch
            %188 = sbr.rel (0) target = $region40
          $region39: #{encoder_block_forward.1} parent=35 // pred_region
            // Predicated region
            $region41: #{encoder_block_forward.1} parent=39 // pred_check
              _
            $region42: #{encoder_block_forward.1} parent=39 // pred_check_branch
              %190 = sbr.rel (0) target = $region44
            $region43: #{encoder_block_forward.1} parent=39 // pred_region
              // Predicated region
              $region56: #{encoder_block_forward.1} parent=43 // pred_check
                _
              $region57: #{encoder_block_forward.1} parent=43 // pred_check_branch
                %207 = sbr.rel (0) target = $region59
              $region58: #{encoder_block_forward.1} parent=43 // pred_region
                loop: start=0, step=1, limit=1
                $region60: #{encoder_block_forward.1} parent=58 // loop_pre_header
                  _
                $region61: #{encoder_block_forward.1} parent=58 // loop_header
                  %s209 = sphi 0, %s213
                  %p210 = scmp.ge.s32.totalorder %s209, 1
                  %s214 = sphi %s186, %s186
                  %s215 = sphi %s184, %s184
                $region62: #{encoder_block_forward.1} parent=58 // loop_header_branch
                  %212 = sbr.rel (%p210) target = $region66
                $region63: #{encoder_block_forward.1} parent=58 // loop_body
                  %v216 = vld [vmem:[%s214] sm:$0xff]
                  %217 = vst [vmem:[%s215] sm:$0xff] %v216
                  %v218 = vld [vmem:[%s214 + $0x10] sm:$0xff]
                  %219 = vst [vmem:[%s215 + $0x8] sm:$0xff] %v218
                $region64: #{encoder_block_forward.1} parent=58 // loop_footer
                  %s213 = sadd.s32 1, %s209
                $region65: #{encoder_block_forward.1} parent=58 // loop_footer_branch
                  %208 = sbr.rel target = $region61
                $region66: #{encoder_block_forward.1} parent=58 // loop_exit
                  _
              $region59: #{encoder_block_forward.1} parent=43 // pred_fallthru
                _
              // Predicated region
              $region67: #{encoder_block_forward.1} parent=43 // pred_check
                _
              $region68: #{encoder_block_forward.1} parent=43 // pred_check_branch
                %221 = sbr.rel target = $region70
              $region69: #{encoder_block_forward.1} parent=43 // pred_region
                _
              $region70: #{encoder_block_forward.1} parent=43 // pred_fallthru
                _
            $region44: #{encoder_block_forward.1} parent=39 // pred_fallthru
              _
            // Predicated region
            $region45: #{encoder_block_forward.1} parent=39 // pred_check
              _
            $region46: #{encoder_block_forward.1} parent=39 // pred_check_branch
              %192 = sbr.rel target = $region48
            $region47: #{encoder_block_forward.1} parent=39 // pred_region
              loop: start=0, step=1, limit=1
              $region49: #{encoder_block_forward.1} parent=47 // loop_pre_header
                _
              $region50: #{encoder_block_forward.1} parent=47 // loop_header
                %s195 = sphi 0, %s199
                %p196 = scmp.ge.s32.totalorder %s195, 1
                %s200 = sphi %s186, %s186
                %s201 = sphi %s184, %s184
              $region51: #{encoder_block_forward.1} parent=47 // loop_header_branch
                %198 = sbr.rel (%p196) target = $region55
              $region52: #{encoder_block_forward.1} parent=47 // loop_body
                %v202 = vld [vmem:[%s200] sm:$0xff]
                %203 = vst [vmem:[%s201] sm:$0xff] %v202
                %v204 = vld [vmem:[%s200 + $0x10] sm:$0xff]
                %205 = vst [vmem:[%s201 + $0x8] sm:$0xff] %v204
              $region53: #{encoder_block_forward.1} parent=47 // loop_footer
                %s199 = sadd.s32 1, %s195
              $region54: #{encoder_block_forward.1} parent=47 // loop_footer_branch
                %194 = sbr.rel target = $region50
              $region55: #{encoder_block_forward.1} parent=47 // loop_exit
                _
            $region48: #{encoder_block_forward.1} parent=39 // pred_fallthru
              _
          $region40: #{encoder_block_forward.1} parent=35 // pred_fallthru
            _
          %222 = vnop
        $region36: #{encoder_block_forward.1} parent=31 // pred_fallthru
          _
      $region32: #{encoder_block_forward.1} parent=5 // pred_fallthru
        _
      %p223 = scmp.le.s32.totalorder 1, %s11
      %p224 = scmp.lt.s32.totalorder %s11, 3
      %p225 = pnand %p223, %p224
      %p226 = pneg %p225
      // Predicated region
      $region71: #{encoder_block_forward.1} parent=5 // pred_check
        _
      $region72: #{encoder_block_forward.1} parent=5 // pred_check_branch
        %228 = sbr.rel (%p225) target = $region74
      $region73: #{encoder_block_forward.1} parent=5 // pred_region
        %s229 = ssub.s32 %s11, 1
        %s230 = sand.u32 %s24, 1
        %s231 = sand.u32 %s24, 1
        %s232 = smul.addr %s231, 16
        %s233 = scalar_lea.vmem [#allocation4], %s232
        // Predicated region
        $region75: #{encoder_block_forward.1} parent=73 // pred_check
          %p234 = pneg %p37
        $region76: #{encoder_block_forward.1} parent=73 // pred_check_branch
          %236 = sbr.rel (%p234) target = $region78
        $region77: #{encoder_block_forward.1} parent=73 // pred_region
          _
        $region78: #{encoder_block_forward.1} parent=73 // pred_fallthru
          _
        %s237 = sand.u32 %s24, 1
        %s238 = sand.u32 %s24, 1
        %s239 = smul.addr %s238, 16
        %s240 = scalar_lea.vmem [#allocation4], %s239
        %p241 = pneg %p37
        %p242 = pneg %p34
        %p243 = pneg %p58
        %p244 = pneg %p55
        %p245 = pneg %p79
        %p246 = pneg %p76
        %p247 = pneg %p100
        %p248 = pneg %p97
        %p249 = pneg %p121
        %p250 = pneg %p118
        %p251 = pneg %p147
        %p252 = pneg %p144
        %p253 = scmp.lt.s32.totalorder %s16, 1
        %s254 = scalar_select %p253, %s16, 1
        %s255 = smul.addr %s254, 8
        %s256 = scalar_lea.vmem %s5, %s255
        %p257 = scmp.lt.s32.totalorder %s16, 1
        %s258 = scalar_select %p257, %s16, 1
        %s259 = smul.addr %s258, 8
        %s260 = scalar_lea.vmem %s5, %s259
        %v262 = vld [vmem:[%s233] sm:$0xff]
        %v263 = vld [vmem:[%s233 + $0x8] sm:$0xff]
        %v264 = vld [vmem:[%s3] sm:$0x1]
        %v265 = vld [vmem:[%s3 + $0x1] sm:$0x1]
        %v266 = vld [vmem:[%s3 + $0x2] sm:$0x1]
        %v267 = vld [vmem:[%s3 + $0x3] sm:$0x1]
        %v268 = vld [vmem:[%s3 + $0x4] sm:$0x1]
        %v269 = vld [vmem:[%s3 + $0x5] sm:$0x1]
        %v270 = vld [vmem:[%s3 + $0x6] sm:$0x1]
        %v271 = vld [vmem:[%s3 + $0x7] sm:$0x1]
        %v272 = vld [vmem:[%s3 + $0x8] sm:$0x1]
        %v273 = vld [vmem:[%s3 + $0x10] sm:$0xff]
        %274 = vadd.xlane.f32.xlu0 %v262
        %v275 = vpop.xlane.xlu0 %274
        %276 = vadd.xlane.f32.xlu0 %v263
        %v277 = vpop.xlane.xlu0 %276
        %v278 = vmul.f32 %v262, %v262
        %v279 = vmul.f32 %v263, %v263
        %280 = vadd.xlane.f32.xlu0 %v278
        %v281 = vpop.xlane.xlu0 %280
        %282 = vadd.xlane.f32.xlu0 %v279
        %v283 = vpop.xlane.xlu0 %282
        %v284 = vld [vmem:[%s4] sm:$0xff]
        %v285 = vld [vmem:[%s4 + $0x8] sm:$0xff]
        %vm286 = vcmask 130048
        %v288 = vsel %vm286, %v284, 0
        %v291 = vsel %vm286, %v285, 0
        %293 = vmatprep.subr.mxu0 0.0
        %294 = vmatpush1.msra.mxu0 %v275
        %295 = vmatprep.subr.mxu0 0.0
        %296 = vmatpush1.msra.mxu0 %v277
        %297 = vmatprep.subr.mxu0 0.0
        %298 = vmatpush1.msra.mxu0 0.0
        %299 = vmatprep.subr.mxu0 0.0
        %300 = vmatpush1.msra.mxu0 0.0
        %301 = vmatprep.subr.mxu0 0.0
        %302 = vmatpush1.msra.mxu0 0.0
        %303 = vmatprep.subr.mxu0 0.0
        %304 = vmatpush1.msra.mxu0 0.0
        %305 = vmatprep.subr.mxu0 0.0
        %306 = vmatpush1.msra.mxu0 0.0
        %307 = vmatprep.subr.mxu0 0.0
        %308 = vmatpush1.msra.mxu0 0.0
        %309 = vmatprep.subr.mxu0 0.0
        %310 = vmatpush1.msra.mxu0 0.0
        %311 = vmatprep.subr.mxu0 0.0
        %312 = vmatpush1.msra.mxu0 0.0
        %313 = vmatprep.subr.mxu0 0.0
        %314 = vmatpush1.msra.mxu0 0.0
        %315 = vmatprep.subr.mxu0 0.0
        %316 = vmatpush1.msra.mxu0 0.0
        %317 = vmatprep.subr.mxu0 0.0
        %318 = vmatpush1.msra.mxu0 0.0
        %319 = vmatprep.subr.mxu0 0.0
        %320 = vmatpush1.msra.mxu0 0.0
        %321 = vmatprep.subr.mxu0 0.0
        %322 = vmatpush1.msra.mxu0 0.0
        %323 = vmatprep.subr.mxu0 0.0
        %324 = vmatpush1.msra.mxu0 0.0
        %325 = vmatprep.subr.mxu0 0.0
        %326 = vmatpush1.msra.mxu0 0.0
        %327 = vmatprep.subr.mxu0 0.0
        %328 = vmatpush1.msra.mxu0 0.0
        %329 = vmatprep.subr.mxu0 0.0
        %330 = vmatpush1.msra.mxu0 0.0
        %331 = vmatprep.subr.mxu0 0.0
        %332 = vmatpush1.msra.mxu0 0.0
        %333 = vmatprep.subr.mxu0 0.0
        %334 = vmatpush1.msra.mxu0 0.0
        %335 = vmatprep.subr.mxu0 0.0
        %336 = vmatpush1.msra.mxu0 0.0
        %337 = vmatprep.subr.mxu0 0.0
        %338 = vmatpush1.msra.mxu0 0.0
        %339 = vmatprep.subr.mxu0 0.0
        %340 = vmatpush1.msra.mxu0 0.0
        %341 = vmatprep.subr.mxu0 0.0
        %342 = vmatpush1.msra.mxu0 0.0
        %343 = vmatprep.subr.mxu0 0.0
        %344 = vmatpush1.msra.mxu0 0.0
        %345 = vmatprep.subr.mxu0 0.0
        %346 = vmatpush1.msra.mxu0 0.0
        %347 = vmatprep.subr.mxu0 0.0
        %348 = vmatpush1.msra.mxu0 0.0
        %349 = vmatprep.subr.mxu0 0.0
        %350 = vmatpush1.msra.mxu0 0.0
        %351 = vmatprep.subr.mxu0 0.0
        %352 = vmatpush1.msra.mxu0 0.0
        %353 = vmatprep.subr.mxu0 0.0
        %354 = vmatpush1.msra.mxu0 0.0
        %355 = vmatprep.subr.mxu0 0.0
        %356 = vmatpush1.msra.mxu0 0.0
        %357 = vmatprep.mubr.f32.mxu0 0.0
        %358 = vmatmul.mubr.f32.gmra.mrb[0].mxu0 %v288
        %v359 = vpop.f32.mrb[0].mxu0
        %v360 = vadd.f32 0.0, %v359
        %v361 = vpop.f32.mrb[0].mxu0
        %362 = vmatprep.mubr.f32.mxu0 0.0
        %363 = vmatmul.mubr.f32.gmra.mrb[0].mxu0 %v291
        %v364 = vpop.f32.mrb[0].mxu0
        %v365 = vadd.f32 0.0, %v364
        %v366 = vpop.f32.mrb[0].mxu0
        %367 = vdwg.mxu0
        %368 = vmatprep.subr.mxu0 0.0
        %369 = vmatpush1.msra.mxu0 %v281
        %370 = vmatprep.subr.mxu0 0.0
        %371 = vmatpush1.msra.mxu0 %v283
        %372 = vmatprep.subr.mxu0 0.0
        %373 = vmatpush1.msra.mxu0 0.0
        %374 = vmatprep.subr.mxu0 0.0
        %375 = vmatpush1.msra.mxu0 0.0
        %376 = vmatprep.subr.mxu0 0.0
        %377 = vmatpush1.msra.mxu0 0.0
        %378 = vmatprep.subr.mxu0 0.0
        %379 = vmatpush1.msra.mxu0 0.0
        %380 = vmatprep.subr.mxu0 0.0
        %381 = vmatpush1.msra.mxu0 0.0
        %382 = vmatprep.subr.mxu0 0.0
        %383 = vmatpush1.msra.mxu0 0.0
        %384 = vmatprep.subr.mxu0 0.0
        %385 = vmatpush1.msra.mxu0 0.0
        %386 = vmatprep.subr.mxu0 0.0
        %387 = vmatpush1.msra.mxu0 0.0
        %388 = vmatprep.subr.mxu0 0.0
        %389 = vmatpush1.msra.mxu0 0.0
        %390 = vmatprep.subr.mxu0 0.0
        %391 = vmatpush1.msra.mxu0 0.0
        %392 = vmatprep.subr.mxu0 0.0
        %393 = vmatpush1.msra.mxu0 0.0
        %394 = vmatprep.subr.mxu0 0.0
        %395 = vmatpush1.msra.mxu0 0.0
        %396 = vmatprep.subr.mxu0 0.0
        %397 = vmatpush1.msra.mxu0 0.0
        %398 = vmatprep.subr.mxu0 0.0
        %399 = vmatpush1.msra.mxu0 0.0
        %400 = vmatprep.subr.mxu0 0.0
        %401 = vmatpush1.msra.mxu0 0.0
        %402 = vmatprep.subr.mxu0 0.0
        %403 = vmatpush1.msra.mxu0 0.0
        %404 = vmatprep.subr.mxu0 0.0
        %405 = vmatpush1.msra.mxu0 0.0
        %406 = vmatprep.subr.mxu0 0.0
        %407 = vmatpush1.msra.mxu0 0.0
        %408 = vmatprep.subr.mxu0 0.0
        %409 = vmatpush1.msra.mxu0 0.0
        %410 = vmatprep.subr.mxu0 0.0
        %411 = vmatpush1.msra.mxu0 0.0
        %412 = vmatprep.subr.mxu0 0.0
        %413 = vmatpush1.msra.mxu0 0.0
        %414 = vmatprep.subr.mxu0 0.0
        %415 = vmatpush1.msra.mxu0 0.0
        %416 = vmatprep.subr.mxu0 0.0
        %417 = vmatpush1.msra.mxu0 0.0
        %418 = vmatprep.subr.mxu0 0.0
        %419 = vmatpush1.msra.mxu0 0.0
        %420 = vmatprep.subr.mxu0 0.0
        %421 = vmatpush1.msra.mxu0 0.0
        %422 = vmatprep.subr.mxu0 0.0
        %423 = vmatpush1.msra.mxu0 0.0
        %424 = vmatprep.subr.mxu0 0.0
        %425 = vmatpush1.msra.mxu0 0.0
        %426 = vmatprep.subr.mxu0 0.0
        %427 = vmatpush1.msra.mxu0 0.0
        %428 = vmatprep.subr.mxu0 0.0
        %429 = vmatpush1.msra.mxu0 0.0
        %430 = vmatprep.subr.mxu0 0.0
        %431 = vmatpush1.msra.mxu0 0.0
        %432 = vmatprep.mubr.f32.mxu0 0.0
        %433 = vmatmul.mubr.f32.gmra.mrb[0].mxu0 %v288
        %v434 = vpop.f32.mrb[0].mxu0
        %v435 = vadd.f32 0.0, %v434
        %v436 = vpop.f32.mrb[0].mxu0
        %437 = vmatprep.mubr.f32.mxu0 0.0
        %438 = vmatmul.mubr.f32.gmra.mrb[0].mxu0 %v291
        %v439 = vpop.f32.mrb[0].mxu0
        %v440 = vadd.f32 0.0, %v439
        %v441 = vpop.f32.mrb[0].mxu0
        %442 = vdwg.mxu0
        %v443 = vmul.f32 %v360, 0.00390625
        %v444 = vmul.f32 %v365, 0.00390625
        %v445 = vmul.f32 %v435, 0.00390625
        %v446 = vmul.f32 %v440, 0.00390625
        %v447 = vmul.f32 %v443, %v443
        %v448 = vmul.f32 %v444, %v444
        %v449 = vsub.f32 %v445, %v447
        %v450 = vsub.f32 %v446, %v448
        %452 = vset.pattern.permute.xlu0 0
        %453 = vperm.xlu0 %452, %v443
        %v454 = vpop.permute.xlu0 %453
        %457 = vset.pattern.permute.xlu0 0
        %458 = vperm.xlu0 %457, %v444
        %v459 = vpop.permute.xlu0 %458
        %v461 = vsub.f32 %v262, %v454
        %v462 = vsub.f32 %v263, %v459
        %v463 = vadd.f32 %v449, 1e-05
        %v464 = vadd.f32 %v450, 1e-05
        %v465 = vrsqrt.pop %v463
        %v466 = vrsqrt.pop %v464
        %468 = vset.pattern.permute.xlu0 0
        %469 = vperm.xlu0 %468, %v465
        %v470 = vpop.permute.xlu0 %469
        %473 = vset.pattern.permute.xlu0 0
        %474 = vperm.xlu0 %473, %v466
        %v475 = vpop.permute.xlu0 %474
        %v477 = vmul.f32 %v461, %v470
        %v478 = vmul.f32 %v462, %v475
        %vm479 = vcmp.ge.f32.partialorder %v477, 0.0
        %vm480 = vcmp.ge.f32.partialorder %v478, 0.0
        %v481 = vmul.f32 %v477, 0.1
        %v482 = vmul.f32 %v478, 0.1
        %v483 = vsel %vm479, %v477, %v481
        %v484 = vsel %vm480, %v478, %v482
        %485 = vrot.lane.b32.xlu0 %v483, 9
        %v486 = vpop.permute.xlu0 %485
        %487 = vrot.lane.b32.xlu0 %v484, 9
        %v488 = vpop.permute.xlu0 %487
        %v489 = vlaneseq
        %v490 = vshrl.u32 %v489, 7
        %v491 = vsub.s32 0, %v490
        %v492 = vrot.slane %v264, %v491
        %v493 = vmul.f32 %v486, %v492
        %v494 = vmul.f32 %v488, %v492
        %495 = vst [vmem:[#allocation2] sm:$0xff] %v493
        %496 = vst [vmem:[#allocation2 + $0x8] sm:$0xff] %v494
        %497 = vrot.lane.b32.xlu0 %v483, 8
        %v498 = vpop.permute.xlu0 %497
        %499 = vrot.lane.b32.xlu0 %v484, 8
        %v500 = vpop.permute.xlu0 %499
        %v501 = vlaneseq
        %v502 = vshrl.u32 %v501, 7
        %v503 = vsub.s32 0, %v502
        %v504 = vrot.slane %v265, %v503
        %v505 = vmul.f32 %v498, %v504
        %v506 = vmul.f32 %v500, %v504
        %507 = vst [vmem:[#allocation2 + $0x10] sm:$0xff] %v505
        %508 = vst [vmem:[#allocation2 + $0x18] sm:$0xff] %v506
        %509 = vrot.lane.b32.xlu0 %v483, 7
        %v510 = vpop.permute.xlu0 %509
        %511 = vrot.lane.b32.xlu0 %v484, 7
        %v512 = vpop.permute.xlu0 %511
        %v513 = vlaneseq
        %v514 = vshrl.u32 %v513, 7
        %v515 = vsub.s32 0, %v514
        %v516 = vrot.slane %v266, %v515
        %v517 = vmul.f32 %v510, %v516
        %v518 = vmul.f32 %v512, %v516
        %519 = vst [vmem:[#allocation2 + $0x20] sm:$0xff] %v517
        %520 = vst [vmem:[#allocation2 + $0x28] sm:$0xff] %v518
        %521 = vrot.lane.b32.xlu0 %v483, 1
        %v522 = vpop.permute.xlu0 %521
        %523 = vrot.lane.b32.xlu0 %v484, 1
        %v524 = vpop.permute.xlu0 %523
        %v525 = vlaneseq
        %v526 = vshrl.u32 %v525, 7
        %v527 = vsub.s32 0, %v526
        %v528 = vrot.slane %v267, %v527
        %v529 = vmul.f32 %v522, %v528
        %v530 = vmul.f32 %v524, %v528
        %531 = vst [vmem:[#allocation2 + $0x30] sm:$0xff] %v529
        %532 = vst [vmem:[#allocation2 + $0x38] sm:$0xff] %v530
        %v533 = vlaneseq
        %v534 = vshrl.u32 %v533, 7
        %v535 = vsub.s32 0, %v534
        %v536 = vrot.slane %v268, %v535
        %v537 = vmul.f32 %v483, %v536
        %v538 = vmul.f32 %v484, %v536
        %539 = vst [vmem:[#allocation2 + $0x40] sm:$0xff] %v537
        %540 = vst [vmem:[#allocation2 + $0x48] sm:$0xff] %v538
        %541 = vrot.lane.b32.xlu0 %v483, 127
        %v542 = vpop.permute.xlu0 %541
        %543 = vrot.lane.b32.xlu0 %v484, 127
        %v544 = vpop.permute.xlu0 %543
        %v545 = vlaneseq
        %v546 = vshrl.u32 %v545, 7
        %v547 = vsub.s32 0, %v546
        %v548 = vrot.slane %v269, %v547
        %v549 = vmul.f32 %v542, %v548
        %v550 = vmul.f32 %v544, %v548
        %551 = vst [vmem:[#allocation2 + $0x50] sm:$0xff] %v549
        %552 = vst [vmem:[#allocation2 + $0x58] sm:$0xff] %v550
        %553 = vrot.lane.b32.xlu0 %v483, 121
        %v554 = vpop.permute.xlu0 %553
        %555 = vrot.lane.b32.xlu0 %v484, 121
        %v556 = vpop.permute.xlu0 %555
        %v557 = vlaneseq
        %v558 = vshrl.u32 %v557, 7
        %v559 = vsub.s32 0, %v558
        %v560 = vrot.slane %v270, %v559
        %v561 = vmul.f32 %v554, %v560
        %v562 = vmul.f32 %v556, %v560
        %563 = vst [vmem:[#allocation2 + $0x60] sm:$0xff] %v561
        %564 = vst [vmem:[#allocation2 + $0x68] sm:$0xff] %v562
        %565 = vrot.lane.b32.xlu0 %v483, 120
        %v566 = vpop.permute.xlu0 %565
        %567 = vrot.lane.b32.xlu0 %v484, 120
        %v568 = vpop.permute.xlu0 %567
        %v569 = vlaneseq
        %v570 = vshrl.u32 %v569, 7
        %v571 = vsub.s32 0, %v570
        %v572 = vrot.slane %v271, %v571
        %v573 = vmul.f32 %v566, %v572
        %v574 = vmul.f32 %v568, %v572
        %575 = vst [vmem:[#allocation2 + $0x70] sm:$0xff] %v573
        %576 = vst [vmem:[#allocation2 + $0x78] sm:$0xff] %v574
        %577 = vrot.lane.b32.xlu0 %v483, 119
        %v578 = vpop.permute.xlu0 %577
        %579 = vrot.lane.b32.xlu0 %v484, 119
        %v580 = vpop.permute.xlu0 %579
        %v581 = vlaneseq
        %v582 = vshrl.u32 %v581, 7
        %v583 = vsub.s32 0, %v582
        %v584 = vrot.slane %v272, %v583
        %v585 = vmul.f32 %v578, %v584
        %v586 = vmul.f32 %v580, %v584
        %587 = vst [vmem:[#allocation2 + $0x80] sm:$0xff] %v585
        %588 = vst [vmem:[#allocation2 + $0x88] sm:$0xff] %v586
        %589 = vst [vmem:[#allocation2 + $0x90] sm:$0xff] %v273
        %v590 = vld [vmem:[%s1] sm:$0xff]
        %v591 = vld [vmem:[#allocation2] sm:$0xff]
        %v592 = vld [vmem:[#allocation2 + $0x8] sm:$0xff]
        %v593 = vld [vmem:[#allocation2 + $0x10] sm:$0xff]
        %v594 = vld [vmem:[#allocation2 + $0x18] sm:$0xff]
        %v595 = vld [vmem:[#allocation2 + $0x20] sm:$0xff]
        %v596 = vld [vmem:[#allocation2 + $0x28] sm:$0xff]
        %v597 = vld [vmem:[#allocation2 + $0x30] sm:$0xff]
        %v598 = vld [vmem:[#allocation2 + $0x38] sm:$0xff]
        %v599 = vld [vmem:[#allocation2 + $0x40] sm:$0xff]
        %v600 = vld [vmem:[#allocation2 + $0x48] sm:$0xff]
        %v601 = vld [vmem:[#allocation2 + $0x50] sm:$0xff]
        %v602 = vld [vmem:[#allocation2 + $0x58] sm:$0xff]
        %v603 = vld [vmem:[#allocation2 + $0x60] sm:$0xff]
        %v604 = vld [vmem:[#allocation2 + $0x68] sm:$0xff]
        %v605 = vld [vmem:[#allocation2 + $0x70] sm:$0xff]
        %v606 = vld [vmem:[#allocation2 + $0x78] sm:$0xff]
        %v607 = vld [vmem:[#allocation2 + $0x80] sm:$0xff]
        %v608 = vld [vmem:[#allocation2 + $0x88] sm:$0xff]
        %v609 = vld [vmem:[#allocation2 + $0x90] sm:$0xff]
        %v610 = vpack.c.bf16 %v592, %v591
        %v611 = vpack.c.bf16 %v594, %v593
        %v612 = vpack.c.bf16 %v596, %v595
        %v613 = vpack.c.bf16 %v598, %v597
        %v614 = vpack.c.bf16 %v600, %v599
        %v615 = vpack.c.bf16 %v602, %v601
        %v616 = vpack.c.bf16 %v604, %v603
        %v617 = vpack.c.bf16 %v606, %v605
        %v618 = vpack.c.bf16 %v608, %v607
        %v619 = vpack.c.bf16 %v609, %v609
        %v621 = vunpack.c.l.b16 %v590
        %v622 = vunpack.c.h.b16 %v590
        %v623 = vpack.c.b16 %v621, %v621
        %v624 = vpack.c.b16 %v622, %v622
        %vm626 = vcmask 195584
        %v628 = vsel %vm626, %v624, 0
        %vm630 = vcmask 1043456
        %v632 = vsel %vm630, %v619, 0
        %634 = vmatprep.subr.bf16.mxu0 0
        %635 = vmatpush1.bf16.msra.mxu0 %v610
        %636 = vmatprep.subr.bf16.mxu0 0
        %637 = vmatpush1.bf16.msra.mxu0 %v611
        %638 = vmatprep.subr.bf16.mxu0 0
        %639 = vmatpush1.bf16.msra.mxu0 %v612
        %640 = vmatprep.subr.bf16.mxu0 0
        %641 = vmatpush1.bf16.msra.mxu0 %v613
        %642 = vmatprep.subr.bf16.mxu0 0
        %643 = vmatpush1.bf16.msra.mxu0 %v614
        %644 = vmatprep.subr.bf16.mxu0 0
        %645 = vmatpush1.bf16.msra.mxu0 %v615
        %646 = vmatprep.subr.bf16.mxu0 0
        %647 = vmatpush1.bf16.msra.mxu0 %v616
        %648 = vmatprep.subr.bf16.mxu0 0
        %649 = vmatpush1.bf16.msra.mxu0 %v617
        %650 = vmatprep.subr.bf16.mxu0 0
        %651 = vmatpush1.bf16.msra.mxu0 %v618
        %652 = vmatprep.subr.bf16.mxu0 0
        %653 = vmatpush1.bf16.msra.mxu0 %v632
        %654 = vmatprep.subr.bf16.mxu0 0
        %655 = vmatpush1.bf16.msra.mxu0 0
        %656 = vmatprep.subr.bf16.mxu0 0
        %657 = vmatpush1.bf16.msra.mxu0 0
        %658 = vmatprep.subr.bf16.mxu0 0
        %659 = vmatpush1.bf16.msra.mxu0 0
        %660 = vmatprep.subr.bf16.mxu0 0
        %661 = vmatpush1.bf16.msra.mxu0 0
        %662 = vmatprep.subr.bf16.mxu0 0
        %663 = vmatpush1.bf16.msra.mxu0 0
        %664 = vmatprep.subr.bf16.mxu0 0
        %665 = vmatpush1.bf16.msra.mxu0 0
        %666 = vmatprep.mubr.bf16.mxu0 %v628
        %667 = vmatmul.mubr.bf16.gmra.mrb[0].mxu0 %v623
        %v668 = vpop.f32.mrb[0].mxu0
        %v669 = vadd.f32 0.0, %v668
        %v670 = vpop.f32.mrb[0].mxu0
        %v671 = vpop.f32.mrb[0].mxu0
        %v672 = vpop.f32.mrb[0].mxu0
        %673 = vdwg.mxu0
        %674 = vadd.xlane.f32.xlu0 %v669
        %v675 = vpop.xlane.xlu0 %674
        %v676 = vmul.f32 %v669, %v669
        %677 = vadd.xlane.f32.xlu0 %v676
        %v678 = vpop.xlane.xlu0 %677
        %v679 = vmul.f32 %v675, 0.015625
        %v680 = vmul.f32 %v678, 0.015625
        %v681 = vmul.f32 %v679, %v679
        %v682 = vsub.f32 %v680, %v681
        %v683 = vsub.f32 %v669, %v679
        %v684 = vadd.f32 %v682, 1e-05
        %v685 = vrsqrt.pop %v684
        %v686 = vmul.f32 %v683, %v685
        %vm687 = vcmp.ge.f32.partialorder %v686, 0.0
        %v688 = vmul.f32 %v686, 0.1
        %v689 = vsel %vm687, %v686, %v688
        %690 = vrot.lane.b32.xlu0 %v689, 9
        %v691 = vpop.permute.xlu0 %690
        %v692 = vmul.f32 %v691, %v492
        %693 = vst [vmem:[#allocation3] sm:$0xff] %v692
        %694 = vrot.lane.b32.xlu0 %v689, 8
        %v695 = vpop.permute.xlu0 %694
        %v696 = vmul.f32 %v695, %v504
        %697 = vst [vmem:[#allocation3 + $0x8] sm:$0xff] %v696
        %698 = vrot.lane.b32.xlu0 %v689, 7
        %v699 = vpop.permute.xlu0 %698
        %v700 = vmul.f32 %v699, %v516
        %701 = vst [vmem:[#allocation3 + $0x10] sm:$0xff] %v700
        %702 = vrot.lane.b32.xlu0 %v689, 1
        %v703 = vpop.permute.xlu0 %702
        %v704 = vmul.f32 %v703, %v528
        %705 = vst [vmem:[#allocation3 + $0x18] sm:$0xff] %v704
        %v706 = vmul.f32 %v689, %v536
        %707 = vst [vmem:[#allocation3 + $0x20] sm:$0xff] %v706
        %708 = vrot.lane.b32.xlu0 %v689, 127
        %v709 = vpop.permute.xlu0 %708
        %v710 = vmul.f32 %v709, %v548
        %711 = vst [vmem:[#allocation3 + $0x28] sm:$0xff] %v710
        %712 = vrot.lane.b32.xlu0 %v689, 121
        %v713 = vpop.permute.xlu0 %712
        %v714 = vmul.f32 %v713, %v560
        %715 = vst [vmem:[#allocation3 + $0x30] sm:$0xff] %v714
        %716 = vrot.lane.b32.xlu0 %v689, 120
        %v717 = vpop.permute.xlu0 %716
        %v718 = vmul.f32 %v717, %v572
        %719 = vst [vmem:[#allocation3 + $0x38] sm:$0xff] %v718
        %720 = vrot.lane.b32.xlu0 %v689, 119
        %v721 = vpop.permute.xlu0 %720
        %v722 = vmul.f32 %v721, %v584
        %723 = vst [vmem:[#allocation3 + $0x40] sm:$0xff] %v722
        %724 = vst [vmem:[#allocation3 + $0x48] sm:$0xff] %v273
        %v725 = vld [vmem:[%s2] sm:$0xf]
        %v726 = vld [vmem:[#allocation3] sm:$0xff]
        %v727 = vld [vmem:[#allocation3 + $0x8] sm:$0xff]
        %v728 = vld [vmem:[#allocation3 + $0x10] sm:$0xff]
        %v729 = vld [vmem:[#allocation3 + $0x18] sm:$0xff]
        %v730 = vld [vmem:[#allocation3 + $0x20] sm:$0xff]
        %v731 = vld [vmem:[#allocation3 + $0x28] sm:$0xff]
        %v732 = vld [vmem:[#allocation3 + $0x30] sm:$0xff]
        %v733 = vld [vmem:[#allocation3 + $0x38] sm:$0xff]
        %v734 = vld [vmem:[#allocation3 + $0x40] sm:$0xff]
        %v735 = vld [vmem:[#allocation3 + $0x48] sm:$0xff]
        %v736 = vpack.c.bf16 %v727, %v726
        %v737 = vpack.c.bf16 %v729, %v728
        %v738 = vpack.c.bf16 %v731, %v730
        %v739 = vpack.c.bf16 %v733, %v732
        %v740 = vpack.c.bf16 %v735, %v734
        %vm741 = vcmask 654336
        %v743 = vsel %vm741, %v725, 0
        %745 = vmatprep.subr.bf16.mxu0 0
        %746 = vmatpush1.bf16.msra.mxu0 %v736
        %747 = vmatprep.subr.bf16.mxu0 0
        %748 = vmatpush1.bf16.msra.mxu0 %v737
        %749 = vmatprep.subr.bf16.mxu0 0
        %750 = vmatpush1.bf16.msra.mxu0 %v738
        %751 = vmatprep.subr.bf16.mxu0 0
        %752 = vmatpush1.bf16.msra.mxu0 %v739
        %753 = vmatprep.subr.bf16.mxu0 0
        %754 = vmatpush1.bf16.msra.mxu0 %v740
        %755 = vmatprep.subr.bf16.mxu0 0
        %756 = vmatpush1.bf16.msra.mxu0 0
        %757 = vmatprep.subr.bf16.mxu0 0
        %758 = vmatpush1.bf16.msra.mxu0 0
        %759 = vmatprep.subr.bf16.mxu0 0
        %760 = vmatpush1.bf16.msra.mxu0 0
        %761 = vmatprep.subr.bf16.mxu0 0
        %762 = vmatpush1.bf16.msra.mxu0 0
        %763 = vmatprep.subr.bf16.mxu0 0
        %764 = vmatpush1.bf16.msra.mxu0 0
        %765 = vmatprep.subr.bf16.mxu0 0
        %766 = vmatpush1.bf16.msra.mxu0 0
        %767 = vmatprep.subr.bf16.mxu0 0
        %768 = vmatpush1.bf16.msra.mxu0 0
        %769 = vmatprep.subr.bf16.mxu0 0
        %770 = vmatpush1.bf16.msra.mxu0 0
        %771 = vmatprep.subr.bf16.mxu0 0
        %772 = vmatpush1.bf16.msra.mxu0 0
        %773 = vmatprep.subr.bf16.mxu0 0
        %774 = vmatpush1.bf16.msra.mxu0 0
        %775 = vmatprep.subr.bf16.mxu0 0
        %776 = vmatpush1.bf16.msra.mxu0 0
        %777 = vmatprep.mubr.bf16.mxu0 0
        %778 = vmatmul.mubr.bf16.gmra.mrb[0].mxu0 %v743
        %v779 = vpop.f32.mrb[0].mxu0
        %v780 = vadd.f32 0.0, %v779
        %v781 = vpop.f32.mrb[0].mxu0
        %v782 = vpop.f32.mrb[0].mxu0
        %v783 = vpop.f32.mrb[0].mxu0
        %784 = vdwg.mxu0
        %785 = vst [vmem:[%s260] sm:$0xff] %v780
        %p786 = scmp.lt.s32.totalorder %s16, 1
        %s787 = scalar_select %p786, %s16, 1
        %s788 = smul.addr %s787, 8
        %s789 = scalar_lea.vmem %s5, %s788
        // Predicated region
        $region79: #{encoder_block_forward.1} parent=73 // pred_check
          %p790 = pneg %p144
        $region80: #{encoder_block_forward.1} parent=73 // pred_check_branch
          %792 = sbr.rel (%p790) target = $region82
        $region81: #{encoder_block_forward.1} parent=73 // pred_region
          _
        $region82: #{encoder_block_forward.1} parent=73 // pred_fallthru
          _
      $region74: #{encoder_block_forward.1} parent=5 // pred_fallthru
        _
      %p793 = scmp.le.s32.totalorder 2, %s11
      // Predicated region
      $region83: #{encoder_block_forward.1} parent=5 // pred_check
        %p794 = pneg %p793
      $region84: #{encoder_block_forward.1} parent=5 // pred_check_branch
        %796 = sbr.rel (%p794) target = $region86
      $region85: #{encoder_block_forward.1} parent=5 // pred_region
        %s797 = ssub.s32 %s11, 2
        // Predicated region
        $region87: #{encoder_block_forward.1} parent=85 // pred_check
          %p798 = pneg %p150
        $region88: #{encoder_block_forward.1} parent=85 // pred_check_branch
          %800 = sbr.rel (%p798) target = $region90
        $region89: #{encoder_block_forward.1} parent=85 // pred_region
          %p801 = scmp.lt.s32.totalorder %s17, 1
          %s802 = scalar_select %p801, %s17, 1
          %s803 = smul.addr %s802, 8
          %s804 = scalar_lea.vmem %s5, %s803
        $region90: #{encoder_block_forward.1} parent=85 // pred_fallthru
          _
      $region86: #{encoder_block_forward.1} parent=5 // pred_fallthru
        _
    $region6: #{encoder_block_forward.1} parent=1 // loop_footer
      %s15 = sadd.s32 1, %s11
    $region7: #{encoder_block_forward.1} parent=1 // loop_footer_branch
      %10 = sbr.rel target = $region3
    $region8: #{encoder_block_forward.1} parent=1 // loop_exit
      _

</llo_original>
